<compile_context>
chip_gen: v6e
topology: v6e:2x2x1
jax: 0.10.0
libtpu: 0.0.40
codegen_flags: <defaults>
</compile_context>

<pallas_src>
import functools

import jax
import jax.numpy as jnp
from jax.experimental import pallas as pl
from jax.experimental.pallas import tpu as pltpu


def _round_up(x, m):
    return ((x + m - 1) // m) * m


def _gce_kernel(x_ref, t_ref, n_ref, o_ref, *, class_weights, q, eps):
    # x_ref: (C, TR, 128) logits in native dtype (batch packed sublane x lane)
    # t_ref: (TR, 128)    int8 targets
    # n_ref: (1,)         int32 valid-sample count (SMEM)
    # o_ref: (1, 8, 128)  per-block partial sums
    x = x_ref[...].astype(jnp.float32)                 # (C, TR, 128)
    t = t_ref[...].astype(jnp.int32)                   # (TR, 128)
    num_classes, tr, _ = x.shape
    inv_q = 1.0 / q

    # Softmax over the (small, leading) class axis -- dense (TR,128) vreg math.
    m = jnp.max(x, axis=0)                             # (TR, 128)
    e = jnp.exp(x - m[None])                           # (C, TR, 128)
    denom = jnp.sum(e, axis=0)                         # (TR, 128)

    # Gather weight[target] * e[target] with a small unrolled per-class select
    # (weights are compile-time constants; no iota / masked reduce needed).
    num = jnp.zeros_like(denom)
    for c in range(num_classes):
        num = jnp.where(t == c, class_weights[c] * e[c], num)

    p_t = num / denom + eps                            # (TR, 128), > 0 always
    loss = (1.0 - jnp.exp(q * jnp.log(p_t))) * inv_q   # (TR, 128)

    def store(lv):
        # (TR,128) -> (TR//8, 8, 128) -> sum over axis 0: full-vreg VPU adds,
        # lane-dense unmasked store of the (8,128) partial tile.
        o_ref[...] = lv.reshape(-1, 8, 128).sum(axis=0)[None]

    i = pl.program_id(0)
    is_tail = i == pl.num_programs(0) - 1

    @pl.when(jnp.logical_not(is_tail))
    def _():
        store(loss)

    @pl.when(is_tail)  # padding can only live in the last block
    def _():
        r = jax.lax.broadcasted_iota(jnp.int32, loss.shape, 0)
        l = jax.lax.broadcasted_iota(jnp.int32, loss.shape, 1)
        gidx = (i * tr + r) * 128 + l
        store(jnp.where(gidx < n_ref[0], loss, 0.0))


def generalized_cross_entropy_loss(x, target, weight=(0.5, 0.5), q=0.7,
                                   eps=1e-9, block_rows=1024):
    """x: (N, C) float logits, target: (N,) int labels -> scalar f32 loss."""
    N, C = x.shape
    class_weights = tuple(float(w) for w in weight)
    assert len(class_weights) == C, "weight length must equal number of classes"

    # Pack the batch onto lane-dense (rows, 128) tiles.  Row tiles are kept a
    # multiple of 32 sublanes so the int8 target tile is natively aligned.
    rows = pl.cdiv(N, 128)
    rows_al = _round_up(rows, 32)
    tr = _round_up(min(int(block_rows), rows_al), 32)
    # Prefer >= 2 grid blocks when the data allows (lets 'parallel' use both
    # v7x TensorCores and keeps per-block VMEM small).
    if rows_al // tr < 2 and rows_al >= 64:
        tr = _round_up(pl.cdiv(rows_al, 2), 32)
    padded_rows = _round_up(rows_al, tr)
    num_blocks = padded_rows // tr
    n_pad = padded_rows * 128

    # Layout plumbing in the native logit dtype (no f32 upcast here); targets
    # shipped as int8 (C <= 127 by construction of the module's weight list).
    xt = jnp.pad(x.T, ((0, 0), (0, n_pad - N))).reshape(C, padded_rows, 128)
    t = jnp.pad(target.astype(jnp.int8), (0, n_pad - N)).reshape(padded_rows, 128)
    n_valid = jnp.array([N], dtype=jnp.int32)

    kernel = functools.partial(_gce_kernel, class_weights=class_weights,
                               q=float(q), eps=float(eps))

    # VMEM budget from actual block sizes: double-buffered inputs + f32
    # temporaries + headroom (stays tiny at TR=1024, always < v7x's 64 MiB).
    blk_in = C * tr * 128 * x.dtype.itemsize + tr * 128
    temps = (2 * C + 6) * tr * 128 * 4
    vmem_limit = min(max(2 * blk_in + temps + (1 << 20), 8 << 20), 64 << 20)

    partials = pl.pallas_call(
        kernel,
        grid=(num_blocks,),
        in_specs=[
            pl.BlockSpec((C, tr, 128), lambda i: (0, i, 0)),        # logits
            pl.BlockSpec((tr, 128), lambda i: (i, 0)),              # targets
            pl.BlockSpec(memory_space=pltpu.MemorySpace.SMEM),      # n_valid
        ],
        out_specs=pl.BlockSpec((1, 8, 128), lambda i: (i, 0, 0)),
        out_shape=jax.ShapeDtypeStruct((num_blocks, 8, 128), jnp.float32),
        compiler_params=pltpu.CompilerParams(
            dimension_semantics=("parallel",),
            vmem_limit_bytes=int(vmem_limit),
        ),
        cost_estimate=pl.CostEstimate(
            flops=12 * N * C,
            transcendentals=N * (C + 2),
            bytes_accessed=int(N * C * x.dtype.itemsize + N
                               + num_blocks * 8 * 128 * 4),
        ),
    )(xt, t, n_valid)

    # Tiny final reduction; divide by the *global* N (not per-block).
    return jnp.sum(partials) / N


def _reference(x, target, weight, q=0.7, eps=1e-9):
    p = jnp.asarray(weight, jnp.float32) * jax.nn.softmax(x.astype(jnp.float32), axis=1)
    p = p[jnp.arange(p.shape[0]), target] + eps
    return jnp.mean((1.0 - p ** q) / q)


if __name__ == "__main__":
    key = jax.random.PRNGKey(0)
    k1, k2, k3, k4 = jax.random.split(key, 4)

    weight = [0.5, 0.5]          # module default -> C = 2 classes
    C = 2

    # Small case matching the module's (minibatch, C) contract.
    N = 8
    x = jax.random.normal(k1, (N, C), dtype=jnp.float32)
    target = jax.random.randint(k2, (N,), 0, C, dtype=jnp.int32)
    out = jax.block_until_ready(
        generalized_cross_entropy_loss(x, target, weight, q=0.7, eps=1e-9))
    ref = _reference(x, target, weight, q=0.7, eps=1e-9)
    assert jnp.allclose(out, ref, atol=1e-5, rtol=1e-4), (out, ref)

    # Multi-block + ragged batch: exercises tiling, tail-only masking, and the
    # global-N mean (block_rows=32 forces 3 grid blocks).
    N2 = 70 * 128 + 37
    x2 = jax.random.normal(k3, (N2, C), dtype=jnp.float32)
    target2 = jax.random.randint(k4, (N2,), 0, C, dtype=jnp.int32)
    out2 = jax.block_until_ready(
        generalized_cross_entropy_loss(x2, target2, weight, q=0.7, eps=1e-9,
                                       block_rows=32))
    ref2 = _reference(x2, target2, weight, q=0.7, eps=1e-9)
    assert jnp.allclose(out2, ref2, atol=1e-5, rtol=1e-4), (out2, ref2)

    print("KERNEL_OK")
</pallas_src>

<mosaic_0001>
module attributes {stable_mosaic.version = 11 : i64} {
  func.func @_gce_kernel(%arg0: i32, %arg1: memref<2x32x128xf32, #tpu.memory_space<vmem>>, %arg2: memref<32x128xi8, #tpu.memory_space<vmem>>, %arg3: memref<1xi32, #tpu.memory_space<smem>>, %arg4: memref<1x8x128xf32, #tpu.memory_space<vmem>>) attributes {dimension_semantics = [#tpu.dimension_semantics<parallel>], iteration_bounds = array<i64: 1>, scalar_prefetch = 0 : i64, scratch_operands = 0 : i64, tpu.core_type = #tpu.core_type<tc>, window_params = [{transform_indices = @transform_0, window_bounds = array<i64: 2, 32, 128>}, {transform_indices = @transform_1, window_bounds = array<i64: 32, 128>}, {transform_indices = @transform_2, window_bounds = array<i64: 1>}, {transform_indices = @transform_3, window_bounds = array<i64: 1, 8, 128>}]} {
    %c0 = arith.constant 0 : index
    %c0_0 = arith.constant 0 : index
    %c0_1 = arith.constant 0 : index
    %0 = vector.load %arg1[%c0, %c0_0, %c0_1] : memref<2x32x128xf32, #tpu.memory_space<vmem>>, vector<2x32x128xf32>
    %c0_2 = arith.constant 0 : index
    %c0_3 = arith.constant 0 : index
    %1 = vector.load %arg2[%c0_2, %c0_3] : memref<32x128xi8, #tpu.memory_space<vmem>>, vector<32x128xi8>
    %2 = arith.extsi %1 : vector<32x128xi8> to vector<32x128xi32>
    %cst = arith.constant dense<0xFF800000> : vector<32x128xf32>
    %3 = vector.multi_reduction <maximumf>, %0, %cst [0] : vector<2x32x128xf32> to vector<32x128xf32>
    %4 = vector.shape_cast %3 : vector<32x128xf32> to vector<1x32x128xf32>
    %5 = vector.broadcast %4 : vector<1x32x128xf32> to vector<2x32x128xf32>
    %6 = arith.subf %0, %5 : vector<2x32x128xf32>
    %7 = math.exp %6 : vector<2x32x128xf32>
    %cst_4 = arith.constant dense<0.000000e+00> : vector<32x128xf32>
    %8 = vector.multi_reduction <add>, %7, %cst_4 [0] : vector<2x32x128xf32> to vector<32x128xf32>
    %cst_5 = arith.constant 0.000000e+00 : f32
    %9 = vector.broadcast %cst_5 : f32 to vector<32x128xf32>
    %c0_i32 = arith.constant 0 : i32
    %10 = vector.broadcast %c0_i32 : i32 to vector<32x128xi32>
    %11 = arith.cmpi eq, %2, %10 : vector<32x128xi32>
    %12 = vector.extract_strided_slice %7 {offsets = [0, 0, 0], sizes = [1, 32, 128], strides = [1, 1, 1]} : vector<2x32x128xf32> to vector<1x32x128xf32>
    %13 = vector.shape_cast %12 : vector<1x32x128xf32> to vector<32x128xf32>
    %cst_6 = arith.constant 5.000000e-01 : f32
    %14 = vector.broadcast %cst_6 : f32 to vector<32x128xf32>
    %15 = arith.mulf %14, %13 : vector<32x128xf32>
    %16 = arith.select %11, %15, %9 : vector<32x128xi1>, vector<32x128xf32>
    %c1_i32 = arith.constant 1 : i32
    %17 = vector.broadcast %c1_i32 : i32 to vector<32x128xi32>
    %18 = arith.cmpi eq, %2, %17 : vector<32x128xi32>
    %19 = vector.extract_strided_slice %7 {offsets = [1, 0, 0], sizes = [1, 32, 128], strides = [1, 1, 1]} : vector<2x32x128xf32> to vector<1x32x128xf32>
    %20 = vector.shape_cast %19 : vector<1x32x128xf32> to vector<32x128xf32>
    %cst_7 = arith.constant 5.000000e-01 : f32
    %21 = vector.broadcast %cst_7 : f32 to vector<32x128xf32>
    %22 = arith.mulf %21, %20 : vector<32x128xf32>
    %23 = arith.select %18, %22, %16 : vector<32x128xi1>, vector<32x128xf32>
    %24 = arith.divf %23, %8 : vector<32x128xf32>
    %cst_8 = arith.constant 9.99999971E-10 : f32
    %25 = vector.broadcast %cst_8 : f32 to vector<32x128xf32>
    %26 = arith.addf %24, %25 : vector<32x128xf32>
    %27 = math.log %26 : vector<32x128xf32>
    %cst_9 = arith.constant 0.699999988 : f32
    %28 = vector.broadcast %cst_9 : f32 to vector<32x128xf32>
    %29 = arith.mulf %28, %27 : vector<32x128xf32>
    %30 = math.exp %29 : vector<32x128xf32>
    %cst_10 = arith.constant 1.000000e+00 : f32
    %31 = vector.broadcast %cst_10 : f32 to vector<32x128xf32>
    %32 = arith.subf %31, %30 : vector<32x128xf32>
    %cst_11 = arith.constant 1.42857146 : f32
    %33 = vector.broadcast %cst_11 : f32 to vector<32x128xf32>
    %34 = arith.mulf %32, %33 : vector<32x128xf32>
    %c0_i32_12 = arith.constant 0 : i32
    %35 = arith.cmpi eq, %arg0, %c0_i32_12 : i32
    %true = arith.constant true
    %36 = arith.xori %35, %true : i1
    %37 = arith.extui %36 : i1 to i32
    %c0_i32_13 = arith.constant 0 : i32
    %38 = arith.cmpi ne, %37, %c0_i32_13 : i32
    scf.if %38 {
      %41 = vector.shape_cast %34 : vector<32x128xf32> to vector<4x8x128xf32>
      %cst_15 = arith.constant dense<0.000000e+00> : vector<8x128xf32>
      %42 = vector.multi_reduction <add>, %41, %cst_15 [0] : vector<4x8x128xf32> to vector<8x128xf32>
      %43 = vector.shape_cast %42 : vector<8x128xf32> to vector<1x8x128xf32>
      %c0_16 = arith.constant 0 : index
      %c0_17 = arith.constant 0 : index
      %c0_18 = arith.constant 0 : index
      %44 = vector.load %arg4[%c0_16, %c0_17, %c0_18] : memref<1x8x128xf32, #tpu.memory_space<vmem>>, vector<1x8x128xf32>
      tpu.vector_store %arg4[%c0_16, %c0_17, %c0_18], %43 {strides = array<i32>} : memref<1x8x128xf32, #tpu.memory_space<vmem>>, vector<1x8x128xf32>,
    } else {
    }
    %39 = arith.extui %35 : i1 to i32
    %c0_i32_14 = arith.constant 0 : i32
    %40 = arith.cmpi ne, %39, %c0_i32_14 : i32
    scf.if %40 {
      %41 = tpu.iota {dimensions = array<i32: 0>} : vector<32x128xi32>
      %42 = tpu.iota {dimensions = array<i32: 1>} : vector<32x128xi32>
      %c32_i32 = arith.constant 32 : i32
      %43 = arith.muli %arg0, %c32_i32 : i32
      %44 = vector.broadcast %43 : i32 to vector<32x128xi32>
      %45 = arith.addi %44, %41 : vector<32x128xi32>
      %c128_i32 = arith.constant 128 : i32
      %46 = vector.broadcast %c128_i32 : i32 to vector<32x128xi32>
      %47 = arith.muli %45, %46 : vector<32x128xi32>
      %48 = arith.addi %47, %42 : vector<32x128xi32>
      %c0_15 = arith.constant 0 : index
      %49 = memref.load %arg3[%c0_15] : memref<1xi32, #tpu.memory_space<smem>>
      %50 = vector.broadcast %49 : i32 to vector<32x128xi32>
      %51 = arith.cmpi slt, %48, %50 : vector<32x128xi32>
      %cst_16 = arith.constant 0.000000e+00 : f32
      %52 = vector.broadcast %cst_16 : f32 to vector<32x128xf32>
      %53 = arith.select %51, %34, %52 : vector<32x128xi1>, vector<32x128xf32>
      %54 = vector.shape_cast %53 : vector<32x128xf32> to vector<4x8x128xf32>
      %cst_17 = arith.constant dense<0.000000e+00> : vector<8x128xf32>
      %55 = vector.multi_reduction <add>, %54, %cst_17 [0] : vector<4x8x128xf32> to vector<8x128xf32>
      %56 = vector.shape_cast %55 : vector<8x128xf32> to vector<1x8x128xf32>
      %c0_18 = arith.constant 0 : index
      %c0_19 = arith.constant 0 : index
      %c0_20 = arith.constant 0 : index
      %57 = vector.load %arg4[%c0_18, %c0_19, %c0_20] : memref<1x8x128xf32, #tpu.memory_space<vmem>>, vector<1x8x128xf32>
      tpu.vector_store %arg4[%c0_18, %c0_19, %c0_20], %56 {strides = array<i32>} : memref<1x8x128xf32, #tpu.memory_space<vmem>>, vector<1x8x128xf32>,
    } else {
    }
    return
  }
  func.func @transform_0(%arg0: i32) -> (i32, i32, i32) {
    %c0_i32 = arith.constant 0 : i32
    %c0_i32_0 = arith.constant 0 : i32
    %c0_i32_1 = arith.constant 0 : i32
    return %c0_i32, %arg0, %c0_i32_0 : i32, i32, i32
  }
  func.func @transform_1(%arg0: i32) -> (i32, i32) {
    %c0_i32 = arith.constant 0 : i32
    %c0_i32_0 = arith.constant 0 : i32
    return %arg0, %c0_i32 : i32, i32
  }
  func.func @transform_2(%arg0: i32) -> i32 {
    %c0_i32 = arith.constant 0 : i32
    %c0_i32_0 = arith.constant 0 : i32
    return %c0_i32 : i32
  }
  func.func @transform_3(%arg0: i32) -> (i32, i32, i32) {
    %c0_i32 = arith.constant 0 : i32
    %c0_i32_0 = arith.constant 0 : i32
    %c0_i32_1 = arith.constant 0 : i32
    return %arg0, %c0_i32, %c0_i32_0 : i32, i32, i32
  }
}

</mosaic_0001>

<llo_original>
// kernel: tpu_custom_call.1
$region0: #{tpu_custom_call.1}
  #allocation0 [shape = 'u32[]', space=smem, size = 0x4, offset = 0x4, fixed_abs, tag = 'smem constant byte address 0x4 - core index']
  #allocation1 [shape = 'u32[144,128]{1,0:T(1,128)}', space=vmem, size = 0x12000, scoped, tag = 'internal scratch']
  #allocation2 [shape = 's32[1]{0:T(128)S(6)}', space=smem, size = 0x200, scoped, tag = 'scoped memory for tpu_custom_call.1']
  %s0 = inlined_call_operand.hbm [shape: f32[2,32,128], index: 0, kind: input, shape index: {}]
  %s1 = inlined_call_operand.hbm [shape: s8[32,128], index: 1, kind: input, shape index: {}]
  %s2 = inlined_call_operand.<no memory space> [shape: s32[1], index: 2, kind: input, shape index: {}]
  %s3 = inlined_call_operand.hbm [shape: f32[1,8,128], index: 3, kind: output, shape index: {}]
  %s4 = sld [smem:[#allocation0]]
  $region38: #{tpu_custom_call.1} parent=0
    _
  %s6 = ssub.s32 1, %s4
  %s7 = scalar_select 0, %s6, %s4
  %8 = sst [smem:[#allocation2]] %s2
  $region1: #{tpu_custom_call.1} parent=0
    #allocation3 [shape = 'u8[32768]{0}', space=vmem, size = 0x8000, scoped, tag = 'input window, operand 0, single buffered']
    #allocation4 [shape = 's32[1]{0}', space=sflag, size = 0x4, scoped, tag = 'scoped memory for tpu_custom_call.1']
    #allocation5 [shape = 's32[1]{0}', space=sflag, size = 0x4, scoped, tag = 'scoped memory for tpu_custom_call.1']
    #allocation6 [shape = 'u8[4096]{0}', space=vmem, size = 0x1000, scoped, tag = 'input window, operand 1, single buffered']
    #allocation7 [shape = 's32[1]{0}', space=sflag, size = 0x4, scoped, tag = 'scoped memory for tpu_custom_call.1']
    #allocation8 [shape = 'u8[4096]{0}', space=vmem, size = 0x1000, scoped, tag = 'output window, operand 0, single buffered']
    %9 = vsyncpa [#allocation4], 0
    %10 = vsyncpa [#allocation7], 0
    %11 = vsyncpa [#allocation5], 0
    // Predicated region
    $region2: #{tpu_custom_call.1} parent=1 // pred_check
      _
    $region3: #{tpu_custom_call.1} parent=1 // pred_check_branch
      %13 = sbr.rel (0) target = $region5
    $region4: #{tpu_custom_call.1} parent=1 // pred_region
      %s15 = ssub.s32 1024, 1024
      %16 = vsyncadd [#allocation4], %s15
      %s17 = sshll.u32 [#allocation3], 4
      %s18 = int_to_ptr.vmem [resolvable:$true] %s17
      %23 = dma.hbm_to_vmem [thread:$0]  %s0, 1024, %s18, [#allocation4], 128, 128, 8
    $region5: #{tpu_custom_call.1} parent=1 // pred_fallthru
      _
    // Predicated region
    $region6: #{tpu_custom_call.1} parent=1 // pred_check
      _
    $region7: #{tpu_custom_call.1} parent=1 // pred_check_branch
      %25 = sbr.rel (0) target = $region9
    $region8: #{tpu_custom_call.1} parent=1 // pred_region
      %s27 = ssub.s32 128, 128
      %28 = vsyncadd [#allocation7], %s27
      %s30 = sshll.u32 [#allocation6], 4
      %s31 = int_to_ptr.vmem [resolvable:$true] %s30
      %33 = dma.hbm_to_vmem [thread:$0]  %s1, 128, %s31, [#allocation7]
    $region9: #{tpu_custom_call.1} parent=1 // pred_fallthru
      _
    // Predicated region
    $region10: #{tpu_custom_call.1} parent=1 // pred_check
      _
    $region11: #{tpu_custom_call.1} parent=1 // pred_check_branch
      %35 = sbr.rel (0) target = $region13
    $region12: #{tpu_custom_call.1} parent=1 // pred_region
      _
    $region13: #{tpu_custom_call.1} parent=1 // pred_fallthru
      _
    // Predicated region
    $region14: #{tpu_custom_call.1} parent=1 // pred_check
      _
    $region15: #{tpu_custom_call.1} parent=1 // pred_check_branch
      %37 = sbr.rel (0) target = $region17
    $region16: #{tpu_custom_call.1} parent=1 // pred_region
      %38 = dma.done [#allocation4], 1024
    $region17: #{tpu_custom_call.1} parent=1 // pred_fallthru
      _
    // Predicated region
    $region18: #{tpu_custom_call.1} parent=1 // pred_check
      _
    $region19: #{tpu_custom_call.1} parent=1 // pred_check_branch
      %40 = sbr.rel (0) target = $region21
    $region20: #{tpu_custom_call.1} parent=1 // pred_region
      %41 = dma.done [#allocation7], 128
    $region21: #{tpu_custom_call.1} parent=1 // pred_fallthru
      _
    %v42 = vld [vmem:[#allocation3] sm:$0xff]
    %v43 = vld [vmem:[#allocation3 + $0x8] sm:$0xff]
    %v44 = vld [vmem:[#allocation3 + $0x10] sm:$0xff]
    %v45 = vld [vmem:[#allocation3 + $0x18] sm:$0xff]
    %v46 = vld [vmem:[#allocation3 + $0x20] sm:$0xff]
    %v47 = vld [vmem:[#allocation3 + $0x28] sm:$0xff]
    %v48 = vld [vmem:[#allocation3 + $0x30] sm:$0xff]
    %v49 = vld [vmem:[#allocation3 + $0x38] sm:$0xff]
    %v50 = vld [vmem:[#allocation6] sm:$0xff]
    %v51 = vunpack.c.0.s8 %v50
    %v52 = vunpack.c.1.s8 %v50
    %v53 = vunpack.c.2.s8 %v50
    %v54 = vunpack.c.3.s8 %v50
    %v55 = vmax.f32 %v42, %v46
    %v56 = vmax.f32 %v43, %v47
    %v57 = vmax.f32 %v44, %v48
    %v58 = vmax.f32 %v45, %v49
    %v59 = vsub.f32 %v42, %v55
    %v60 = vsub.f32 %v43, %v56
    %v61 = vsub.f32 %v44, %v57
    %v62 = vsub.f32 %v45, %v58
    %v63 = vsub.f32 %v46, %v55
    %v64 = vsub.f32 %v47, %v56
    %v65 = vsub.f32 %v48, %v57
    %v66 = vsub.f32 %v49, %v58
    %v67 = vmul.f32 %v59, 1.442695
    %v68 = vpow.pop %v67
    %v69 = vmul.f32 %v60, 1.442695
    %v70 = vpow.pop %v69
    %v71 = vmul.f32 %v61, 1.442695
    %v72 = vpow.pop %v71
    %v73 = vmul.f32 %v62, 1.442695
    %v74 = vpow.pop %v73
    %v75 = vmul.f32 %v63, 1.442695
    %v76 = vpow.pop %v75
    %v77 = vmul.f32 %v64, 1.442695
    %v78 = vpow.pop %v77
    %v79 = vmul.f32 %v65, 1.442695
    %v80 = vpow.pop %v79
    %v81 = vmul.f32 %v66, 1.442695
    %v82 = vpow.pop %v81
    %v83 = vadd.f32 %v68, %v76
    %v84 = vadd.f32 %v70, %v78
    %v85 = vadd.f32 %v72, %v80
    %v86 = vadd.f32 %v74, %v82
    %vm87 = vcmp.eq.s32.totalorder %v51, 0
    %vm88 = vcmp.eq.s32.totalorder %v52, 0
    %vm89 = vcmp.eq.s32.totalorder %v53, 0
    %vm90 = vcmp.eq.s32.totalorder %v54, 0
    %v91 = vmul.f32 %v68, 0.5
    %v92 = vmul.f32 %v70, 0.5
    %v93 = vmul.f32 %v72, 0.5
    %v94 = vmul.f32 %v74, 0.5
    %v95 = vsel %vm87, %v91, 0.0
    %v96 = vsel %vm88, %v92, 0.0
    %v97 = vsel %vm89, %v93, 0.0
    %v98 = vsel %vm90, %v94, 0.0
    %vm99 = vcmp.eq.s32.totalorder %v51, 1
    %vm100 = vcmp.eq.s32.totalorder %v52, 1
    %vm101 = vcmp.eq.s32.totalorder %v53, 1
    %vm102 = vcmp.eq.s32.totalorder %v54, 1
    %v103 = vmul.f32 %v76, 0.5
    %v104 = vmul.f32 %v78, 0.5
    %v105 = vmul.f32 %v80, 0.5
    %v106 = vmul.f32 %v82, 0.5
    %v107 = vsel %vm99, %v103, %v95
    %v108 = vsel %vm100, %v104, %v96
    %v109 = vsel %vm101, %v105, %v97
    %v110 = vsel %vm102, %v106, %v98
    %v111 = vrcp.pop %v83
    %v112 = vmul.f32 %v107, %v111
    %v113 = vrcp.pop %v84
    %v114 = vmul.f32 %v108, %v113
    %v115 = vrcp.pop %v85
    %v116 = vmul.f32 %v109, %v115
    %v117 = vrcp.pop %v86
    %v118 = vmul.f32 %v110, %v117
    %v119 = vadd.f32 %v112, 1e-09
    %v120 = vadd.f32 %v114, 1e-09
    %v121 = vadd.f32 %v116, 1e-09
    %v122 = vadd.f32 %v118, 1e-09
    %v123 = vlog2.pop %v119
    %v124 = vmul.f32 %v123, 0.6931472
    %v125 = vlog2.pop %v120
    %v126 = vmul.f32 %v125, 0.6931472
    %v127 = vlog2.pop %v121
    %v128 = vmul.f32 %v127, 0.6931472
    %v129 = vlog2.pop %v122
    %v130 = vmul.f32 %v129, 0.6931472
    %v131 = vmul.f32 %v124, 0.7
    %v132 = vmul.f32 %v126, 0.7
    %v133 = vmul.f32 %v128, 0.7
    %v134 = vmul.f32 %v130, 0.7
    %v135 = vmul.f32 %v131, 1.442695
    %v136 = vpow.pop %v135
    %v137 = vmul.f32 %v132, 1.442695
    %v138 = vpow.pop %v137
    %v139 = vmul.f32 %v133, 1.442695
    %v140 = vpow.pop %v139
    %v141 = vmul.f32 %v134, 1.442695
    %v142 = vpow.pop %v141
    %v143 = vsub.f32 1.0, %v136
    %v144 = vsub.f32 1.0, %v138
    %v145 = vsub.f32 1.0, %v140
    %v146 = vsub.f32 1.0, %v142
    %v147 = vmul.f32 %v143, 1.4285715
    %v148 = vmul.f32 %v144, 1.4285715
    %v149 = vmul.f32 %v145, 1.4285715
    %v150 = vmul.f32 %v146, 1.4285715
    %p151 = scmp.eq.s32.totalorder 0, 0
    %p152 = scmp.ne.s32.totalorder 0, 0
    // Predicated region
    $region22: #{tpu_custom_call.1} parent=1 // pred_check
      %p153 = pneg %p152
    $region23: #{tpu_custom_call.1} parent=1 // pred_check_branch
      %155 = sbr.rel (%p153) target = $region25
    $region24: #{tpu_custom_call.1} parent=1 // pred_region
      %v156 = vadd.f32 %v147, %v148
      %v157 = vadd.f32 %v156, %v149
      %v158 = vadd.f32 %v157, %v150
      %159 = vst [vmem:[#allocation8] sm:$0xff] %v158
    $region25: #{tpu_custom_call.1} parent=1 // pred_fallthru
      _
    // Predicated region
    $region26: #{tpu_custom_call.1} parent=1 // pred_check
      %p160 = pneg %p151
    $region27: #{tpu_custom_call.1} parent=1 // pred_check_branch
      %162 = sbr.rel (%p160) target = $region29
    $region28: #{tpu_custom_call.1} parent=1 // pred_region
      %v163 = vlaneseq
      %v164 = vshrl.u32 %v163, 7
      %v165 = vadd.s32 %v164, 8
      %v166 = vadd.s32 %v164, 16
      %v167 = vadd.s32 %v164, 24
      %v168 = vlaneseq
      %v169 = vand.u32 %v168, 127
      %s170 = smul.u32 0, 32
      %v171 = vstv %s170
      %v172 = vadd.s32 %v171, %v164
      %v173 = vadd.s32 %v171, %v165
      %v174 = vadd.s32 %v171, %v166
      %v175 = vadd.s32 %v171, %v167
      %v176 = vmul.u32 %v172, 128
      %v177 = vmul.u32 %v173, 128
      %v178 = vmul.u32 %v174, 128
      %v179 = vmul.u32 %v175, 128
      %v180 = vadd.s32 %v176, %v169
      %v181 = vadd.s32 %v177, %v169
      %v182 = vadd.s32 %v178, %v169
      %v183 = vadd.s32 %v179, %v169
      %s184 = sld [smem:[#allocation2]]
      %v185 = vstv %s184
      %vm186 = vcmp.lt.s32.totalorder %v180, %v185
      %vm187 = vcmp.lt.s32.totalorder %v181, %v185
      %vm188 = vcmp.lt.s32.totalorder %v182, %v185
      %vm189 = vcmp.lt.s32.totalorder %v183, %v185
      %v190 = vsel %vm186, %v147, 0.0
      %v191 = vsel %vm187, %v148, 0.0
      %v192 = vsel %vm188, %v149, 0.0
      %v193 = vsel %vm189, %v150, 0.0
      %v194 = vadd.f32 %v190, %v191
      %v195 = vadd.f32 %v194, %v192
      %v196 = vadd.f32 %v195, %v193
      %197 = vst [vmem:[#allocation8] sm:$0xff] %v196
    $region29: #{tpu_custom_call.1} parent=1 // pred_fallthru
      _
    // Predicated region
    $region30: #{tpu_custom_call.1} parent=1 // pred_check
      _
    $region31: #{tpu_custom_call.1} parent=1 // pred_check_branch
      %199 = sbr.rel (0) target = $region33
    $region32: #{tpu_custom_call.1} parent=1 // pred_region
      %s201 = ssub.s32 128, 128
      %202 = vsyncadd [#allocation5], %s201
      %s204 = sshll.u32 [#allocation8], 4
      %s205 = int_to_ptr.vmem [resolvable:$true] %s204
      %207 = dma.vmem_to_hbm [thread:$0]  %s205, 128, %s3, [#allocation5]
    $region33: #{tpu_custom_call.1} parent=1 // pred_fallthru
      _
    // Predicated region
    $region34: #{tpu_custom_call.1} parent=1 // pred_check
      _
    $region35: #{tpu_custom_call.1} parent=1 // pred_check_branch
      %209 = sbr.rel (0) target = $region37
    $region36: #{tpu_custom_call.1} parent=1 // pred_region
      %210 = dma.done [#allocation5], 128
    $region37: #{tpu_custom_call.1} parent=1 // pred_fallthru
      _
    %211 = vsyncpa [#allocation4], 1
    %212 = vsyncpa [#allocation7], 1
    %213 = vsyncpa [#allocation5], 1

</llo_original>
